<compile_context>
chip_gen: v7x
topology: tpu7x:2x2x1
jax: 0.10.0
libtpu: 0.0.40
codegen_flags: <defaults>
</compile_context>

<pallas_src>
import jax
import jax.numpy as jnp
from jax import lax
from jax.experimental import pallas as pl
from jax.experimental.pallas import tpu as pltpu


# ----------------------------------------------------------------------------- kernel
def cbam_kernel(x_ref, w1_ref, w2_ref, cm_ref, bias_ref, o_ref):
    # x_ref/o_ref: (Bt, C, H*W)   channels on sublanes, pixels on lanes (lane-dense)
    # w1_ref:      (Cr, C)        SE conv1x1 #1 (shared by max/avg branches)
    # w2_ref:      (C, Cr)        SE conv1x1 #2
    # cm_ref:      (2*HW, HW)     spatial conv as a matmul matrix (zero padding folded in)
    # bias_ref:    (1,) in SMEM   spatial conv bias
    Bt, C, HW = x_ref.shape

    w1 = w1_ref[...]
    w2 = w2_ref[...]
    cm = cm_ref[...]
    bias = bias_ref[0]

    for b in range(Bt):                                   # static unroll over images in the block
        x = x_ref[b]                                      # (C, HW)

        # ---------------- channel attention ----------------
        maxp = jnp.max(x, axis=1, keepdims=True)          # (C, 1)   cross-lane reduce
        avgp = jnp.mean(x, axis=1, keepdims=True)         # (C, 1)
        pooled = jnp.concatenate([maxp, avgp], axis=1)    # (C, 2)   both branches fused

        h = jnp.maximum(
            jnp.dot(w1, pooled, preferred_element_type=jnp.float32), 0.0)   # (Cr, 2)
        y = jnp.dot(w2, h, preferred_element_type=jnp.float32)              # (C, 2)
        ca = jax.nn.sigmoid(y[:, 0:1] + y[:, 1:2])        # (C, 1)

        out = x * ca                                      # (C, HW)  lane splat of ca

        # ---------------- spatial attention ----------------
        maxm = jnp.max(out, axis=0, keepdims=True)        # (1, HW)  sublane reduce
        avgm = jnp.mean(out, axis=0, keepdims=True)       # (1, HW)
        maps = jnp.concatenate([maxm, avgm], axis=1)      # (1, 2*HW)

        conv = jnp.dot(maps, cm, preferred_element_type=jnp.float32) + bias  # (1, HW)
        sa = jax.nn.sigmoid(conv)                         # (1, HW)

        # re-weight spatially (sublane splat of sa) + residual, fused into the store
        o_ref[b] = out * sa + x


# ----------------------------------------------------------------------------- wrapper
def _build_conv_matrix(w_sa, H, W):
    """Fold the 2->1 KxK conv (padding K//2) into a (2*H*W, H*W) matmul matrix.

    conv[q_out] = sum_{c,q_in} maps[c*HW + q_in] * CM[c*HW + q_in, q_out]
    with maps = [max_map_flat | avg_map_flat].
    """
    K = w_sa.shape[-1]
    p = K // 2
    HW = H * W
    q = jnp.arange(HW)
    hh = q // W
    ww = q % W
    dy = hh[:, None] - hh[None, :] + p          # (q_in, q_out)
    dx = ww[:, None] - ww[None, :] + p
    valid = (dy >= 0) & (dy < K) & (dx >= 0) & (dx < K)
    dyc = jnp.clip(dy, 0, K - 1)
    dxc = jnp.clip(dx, 0, K - 1)

    def chan(c):
        vals = w_sa[0, c][dyc, dxc]
        return jnp.where(valid, vals, 0.0).astype(jnp.float32)

    return jnp.concatenate([chan(0), chan(1)], axis=0)    # (2*HW, HW)


def _pick_block_batch(B, bytes_per_image, budget_bytes=2 * 1024 * 1024):
    """Largest divisor of B that fits the VMEM budget and keeps >=2 grid steps (v7x: 2 TCs)."""
    max_bt = max(1, budget_bytes // max(1, bytes_per_image))
    best = 1
    for cand in range(1, B + 1):
        if B % cand:
            continue
        if cand > max_bt:
            continue
        if B >= 2 and B // cand < 2:
            continue
        best = cand
    return best


def cbam_pallas(x_nchw, w_se1, w_se2, w_sa, b_sa):
    """x_nchw: (B, C, H, W) f32. Returns (B, C, H, W) f32 (CBAM forward)."""
    B, C, H, W = x_nchw.shape
    Cr = w_se1.shape[0]
    HW = H * W

    x3 = x_nchw.reshape(B, C, HW).astype(jnp.float32)          # free reshape, lane-dense last dim
    w1 = w_se1.astype(jnp.float32)                             # (Cr, C)
    w2 = w_se2.astype(jnp.float32)                             # (C, Cr)
    cm = _build_conv_matrix(w_sa.astype(jnp.float32), H, W)    # (2*HW, HW)
    bias = b_sa.reshape(1).astype(jnp.float32)

    bytes_per_image = C * HW * 4
    Bt = _pick_block_batch(B, bytes_per_image)
    grid = (B // Bt,)

    # Explicit VMEM budget (item for v7x's smaller 64 MiB VMEM): in+out double-buffered
    # blocks + (double-buffered) conv matrix + SE weights + headroom.
    need = 4 * Bt * bytes_per_image + 2 * int(cm.size) * 4 + 2 * (int(w1.size) + int(w2.size)) * 4
    vmem_limit = int(min(48 * 2**20, max(16 * 2**20, need + (4 << 20))))

    out3 = pl.pallas_call(
        cbam_kernel,
        out_shape=jax.ShapeDtypeStruct((B, C, HW), jnp.float32),
        grid=grid,
        in_specs=[
            pl.BlockSpec((Bt, C, HW), lambda i: (i, 0, 0)),
            pl.BlockSpec((Cr, C), lambda i: (0, 0)),
            pl.BlockSpec((C, Cr), lambda i: (0, 0)),
            pl.BlockSpec((2 * HW, HW), lambda i: (0, 0)),
            pl.BlockSpec(memory_space=pltpu.MemorySpace.SMEM),   # conv bias scalar
        ],
        out_specs=pl.BlockSpec((Bt, C, HW), lambda i: (i, 0, 0)),
        compiler_params=pltpu.CompilerParams(
            dimension_semantics=("parallel",),
            vmem_limit_bytes=vmem_limit),
    )(x3, w1, w2, cm, bias)

    return out3.reshape(B, C, H, W)


# ----------------------------------------------------------------------------- reference
def cbam_reference(x_nchw, w_se1, w_se2, w_sa, b_sa):
    """Pure-JAX reference mirroring the PyTorch CBAMBlock forward (NCHW)."""
    K = w_sa.shape[-1]
    maxp = jnp.max(x_nchw, axis=(2, 3))                   # (B, C)
    avgp = jnp.mean(x_nchw, axis=(2, 3))                  # (B, C)

    def se(v):
        h = jnp.maximum(v @ w_se1.T, 0.0)
        return h @ w_se2.T

    ca = jax.nn.sigmoid(se(maxp) + se(avgp))              # (B, C)
    out = x_nchw * ca[:, :, None, None]

    maxm = jnp.max(out, axis=1, keepdims=True)
    avgm = jnp.mean(out, axis=1, keepdims=True)
    cat = jnp.concatenate([maxm, avgm], axis=1)           # (B, 2, H, W)
    conv = lax.conv_general_dilated(
        cat, w_sa, window_strides=(1, 1),
        padding=[(K // 2, K // 2), (K // 2, K // 2)],
        dimension_numbers=("NCHW", "OIHW", "NCHW"))
    sa = jax.nn.sigmoid(conv + b_sa[None, :, None, None])
    return out * sa + x_nchw


if __name__ == "__main__":
    # Shapes consistent with CBAMBlock(channel=C, reduction=4, kernel_size=7)
    B, C, H, W = 2, 32, 16, 16
    reduction = 4
    Cr = C // reduction
    K = 7

    key = jax.random.PRNGKey(0)
    k1, k2, k3, k4 = jax.random.split(key, 4)

    x = jax.random.normal(k1, (B, C, H, W), jnp.float32)
    w_se1 = jax.random.normal(k2, (Cr, C), jnp.float32) * (2.0 / Cr) ** 0.5   # 1x1 conv C->Cr
    w_se2 = jax.random.normal(k3, (C, Cr), jnp.float32) * (2.0 / C) ** 0.5    # 1x1 conv Cr->C
    w_sa = jax.random.normal(k4, (1, 2, K, K), jnp.float32) * (2.0 / (K * K)) ** 0.5
    b_sa = jnp.zeros((1,), jnp.float32)

    out = cbam_pallas(x, w_se1, w_se2, w_sa, b_sa)
    out = jax.block_until_ready(out)

    ref = cbam_reference(x, w_se1, w_se2, w_sa, b_sa)
    assert out.shape == (B, C, H, W)
    # Tolerance leaves headroom for possible bf16 contract passes on the MXU matmul
    # path vs. the XLA conv reference; a semantic bug would be orders of magnitude larger.
    err = float(jnp.max(jnp.abs(out - ref)))
    assert err < 1e-2, f"max abs err {err}"

    print("KERNEL_OK")
</pallas_src>

<mosaic_0001>
module attributes {stable_mosaic.version = 11 : i64} {
  func.func @cbam_kernel(%arg0: i32, %arg1: memref<1x32x256xf32, #tpu.memory_space<vmem>>, %arg2: memref<8x32xf32, #tpu.memory_space<vmem>>, %arg3: memref<32x8xf32, #tpu.memory_space<vmem>>, %arg4: memref<512x256xf32, #tpu.memory_space<vmem>>, %arg5: memref<1xf32, #tpu.memory_space<smem>>, %arg6: memref<1x32x256xf32, #tpu.memory_space<vmem>>) attributes {dimension_semantics = [#tpu.dimension_semantics<parallel>], iteration_bounds = array<i64: 2>, scalar_prefetch = 0 : i64, scratch_operands = 0 : i64, tpu.core_type = #tpu.core_type<tc>, window_params = [{transform_indices = @transform_0, window_bounds = array<i64: 1, 32, 256>}, {pipeline_mode = #tpu.pipeline_mode<synchronous>, transform_indices = @transform_1, window_bounds = array<i64: 8, 32>}, {pipeline_mode = #tpu.pipeline_mode<synchronous>, transform_indices = @transform_2, window_bounds = array<i64: 32, 8>}, {pipeline_mode = #tpu.pipeline_mode<synchronous>, transform_indices = @transform_3, window_bounds = array<i64: 512, 256>}, {transform_indices = @transform_4, window_bounds = array<i64: 1>}, {transform_indices = @transform_5, window_bounds = array<i64: 1, 32, 256>}]} {
    %c0 = arith.constant 0 : index
    %c0_0 = arith.constant 0 : index
    %0 = vector.load %arg2[%c0, %c0_0] : memref<8x32xf32, #tpu.memory_space<vmem>>, vector<8x32xf32>
    %c0_1 = arith.constant 0 : index
    %c0_2 = arith.constant 0 : index
    %1 = vector.load %arg3[%c0_1, %c0_2] : memref<32x8xf32, #tpu.memory_space<vmem>>, vector<32x8xf32>
    %c0_3 = arith.constant 0 : index
    %c0_4 = arith.constant 0 : index
    %2 = vector.load %arg4[%c0_3, %c0_4] : memref<512x256xf32, #tpu.memory_space<vmem>>, vector<512x256xf32>
    %c0_5 = arith.constant 0 : index
    %3 = memref.load %arg5[%c0_5] : memref<1xf32, #tpu.memory_space<smem>>
    %c0_6 = arith.constant 0 : index
    %c0_7 = arith.constant 0 : index
    %c0_8 = arith.constant 0 : index
    %4 = vector.load %arg1[%c0_6, %c0_7, %c0_8] : memref<1x32x256xf32, #tpu.memory_space<vmem>>, vector<1x32x256xf32>
    %5 = vector.shape_cast %4 : vector<1x32x256xf32> to vector<32x256xf32>
    %cst = arith.constant dense<0xFF800000> : vector<32xf32>
    %6 = vector.multi_reduction <maximumf>, %5, %cst [1] : vector<32x256xf32> to vector<32xf32>
    %7 = vector.shape_cast %6 : vector<32xf32> to vector<32x1xf32>
    %cst_9 = arith.constant dense<0.000000e+00> : vector<32xf32>
    %8 = vector.multi_reduction <add>, %5, %cst_9 [1] : vector<32x256xf32> to vector<32xf32>
    %9 = vector.shape_cast %8 : vector<32xf32> to vector<32x1xf32>
    %cst_10 = arith.constant 2.560000e+02 : f32
    %10 = vector.broadcast %cst_10 : f32 to vector<32x1xf32>
    %11 = arith.divf %9, %10 : vector<32x1xf32>
    %12 = tpu.concatenate %7, %11 in 1 : vector<32x1xf32>, vector<32x1xf32> -> vector<32x2xf32>
    %cst_11 = arith.constant dense<0.000000e+00> : vector<8x2xf32>
    %13 = tpu.matmul %0, %12, %cst_11 {dimension_numbers = #tpu.dot_dimension_numbers<[1], [0], [0], [1], [0, 0, 1, 1], [], []>} : vector<8x32xf32>, vector<32x2xf32>, vector<8x2xf32> -> vector<8x2xf32>
    %cst_12 = arith.constant 0.000000e+00 : f32
    %14 = vector.broadcast %cst_12 : f32 to vector<8x2xf32>
    %15 = arith.maximumf %13, %14 : vector<8x2xf32>
    %cst_13 = arith.constant dense<0.000000e+00> : vector<32x2xf32>
    %16 = tpu.matmul %1, %15, %cst_13 {dimension_numbers = #tpu.dot_dimension_numbers<[1], [0], [0], [1], [0, 0, 1, 1], [], []>} : vector<32x8xf32>, vector<8x2xf32>, vector<32x2xf32> -> vector<32x2xf32>
    %17 = vector.extract_strided_slice %16 {offsets = [0, 0], sizes = [32, 1], strides = [1, 1]} : vector<32x2xf32> to vector<32x1xf32>
    %18 = vector.extract_strided_slice %16 {offsets = [0, 1], sizes = [32, 1], strides = [1, 1]} : vector<32x2xf32> to vector<32x1xf32>
    %19 = arith.addf %17, %18 : vector<32x1xf32>
    %20 = arith.negf %19 : vector<32x1xf32>
    %21 = math.exp %20 : vector<32x1xf32>
    %cst_14 = arith.constant 1.000000e+00 : f32
    %22 = vector.broadcast %cst_14 : f32 to vector<32x1xf32>
    %23 = arith.addf %22, %21 : vector<32x1xf32>
    %24 = arith.divf %22, %23 : vector<32x1xf32>
    %25 = vector.broadcast %24 : vector<32x1xf32> to vector<32x256xf32>
    %26 = arith.mulf %5, %25 : vector<32x256xf32>
    %cst_15 = arith.constant dense<0xFF800000> : vector<256xf32>
    %27 = vector.multi_reduction <maximumf>, %26, %cst_15 [0] : vector<32x256xf32> to vector<256xf32>
    %28 = vector.shape_cast %27 : vector<256xf32> to vector<1x256xf32>
    %cst_16 = arith.constant dense<0.000000e+00> : vector<256xf32>
    %29 = vector.multi_reduction <add>, %26, %cst_16 [0] : vector<32x256xf32> to vector<256xf32>
    %30 = vector.shape_cast %29 : vector<256xf32> to vector<1x256xf32>
    %cst_17 = arith.constant 3.200000e+01 : f32
    %31 = vector.broadcast %cst_17 : f32 to vector<1x256xf32>
    %32 = arith.divf %30, %31 : vector<1x256xf32>
    %33 = tpu.concatenate %28, %32 in 1 : vector<1x256xf32>, vector<1x256xf32> -> vector<1x512xf32>
    %cst_18 = arith.constant dense<0.000000e+00> : vector<1x256xf32>
    %34 = tpu.matmul %33, %2, %cst_18 {dimension_numbers = #tpu.dot_dimension_numbers<[1], [0], [0], [1], [0, 0, 1, 1], [], []>} : vector<1x512xf32>, vector<512x256xf32>, vector<1x256xf32> -> vector<1x256xf32>
    %35 = vector.broadcast %3 : f32 to vector<1x256xf32>
    %36 = arith.addf %34, %35 : vector<1x256xf32>
    %37 = arith.negf %36 : vector<1x256xf32>
    %38 = math.exp %37 : vector<1x256xf32>
    %cst_19 = arith.constant 1.000000e+00 : f32
    %39 = vector.broadcast %cst_19 : f32 to vector<1x256xf32>
    %40 = arith.addf %39, %38 : vector<1x256xf32>
    %41 = arith.divf %39, %40 : vector<1x256xf32>
    %42 = vector.broadcast %41 : vector<1x256xf32> to vector<32x256xf32>
    %43 = arith.mulf %26, %42 : vector<32x256xf32>
    %44 = arith.addf %43, %5 : vector<32x256xf32>
    %c0_20 = arith.constant 0 : index
    %c0_21 = arith.constant 0 : index
    %c0_22 = arith.constant 0 : index
    %45 = vector.load %arg6[%c0_20, %c0_21, %c0_22] : memref<1x32x256xf32, #tpu.memory_space<vmem>>, vector<1x32x256xf32>
    %46 = vector.shape_cast %45 : vector<1x32x256xf32> to vector<32x256xf32>
    %47 = vector.shape_cast %44 : vector<32x256xf32> to vector<1x32x256xf32>
    tpu.vector_store %arg6[%c0_20, %c0_21, %c0_22], %47 {strides = array<i32>} : memref<1x32x256xf32, #tpu.memory_space<vmem>>, vector<1x32x256xf32>,
    return
  }
  func.func @transform_0(%arg0: i32) -> (i32, i32, i32) {
    %c0_i32 = arith.constant 0 : i32
    %c0_i32_0 = arith.constant 0 : i32
    %c0_i32_1 = arith.constant 0 : i32
    return %arg0, %c0_i32, %c0_i32_0 : i32, i32, i32
  }
  func.func @transform_1(%arg0: i32) -> (i32, i32) {
    %c0_i32 = arith.constant 0 : i32
    %c0_i32_0 = arith.constant 0 : i32
    %c0_i32_1 = arith.constant 0 : i32
    return %c0_i32, %c0_i32_0 : i32, i32
  }
  func.func @transform_2(%arg0: i32) -> (i32, i32) {
    %c0_i32 = arith.constant 0 : i32
    %c0_i32_0 = arith.constant 0 : i32
    %c0_i32_1 = arith.constant 0 : i32
    return %c0_i32, %c0_i32_0 : i32, i32
  }
  func.func @transform_3(%arg0: i32) -> (i32, i32) {
    %c0_i32 = arith.constant 0 : i32
    %c0_i32_0 = arith.constant 0 : i32
    %c0_i32_1 = arith.constant 0 : i32
    return %c0_i32, %c0_i32_0 : i32, i32
  }
  func.func @transform_4(%arg0: i32) -> i32 {
    %c0_i32 = arith.constant 0 : i32
    %c0_i32_0 = arith.constant 0 : i32
    return %c0_i32 : i32
  }
  func.func @transform_5(%arg0: i32) -> (i32, i32, i32) {
    %c0_i32 = arith.constant 0 : i32
    %c0_i32_0 = arith.constant 0 : i32
    %c0_i32_1 = arith.constant 0 : i32
    return %arg0, %c0_i32, %c0_i32_0 : i32, i32, i32
  }
}

</mosaic_0001>

<llo_original>
// kernel: tpu_custom_call.1
$region0: #{tpu_custom_call.1}
  #allocation0 [shape = 'u32[]', space=smem, size = 0x4, offset = 0x4, fixed_abs, tag = 'smem constant byte address 0x4 - core index']
  #allocation1 [shape = 'u32[144,128]{1,0:T(1,128)}', space=vmem, size = 0x12000, scoped, tag = 'internal scratch']
  #allocation2 [shape = 'f32[1]{0:T(128)S(6)}', space=smem, size = 0x200, scoped, tag = 'scoped memory for tpu_custom_call.1']
  %s0 = inlined_call_operand.hbm [shape: f32[2,32,256], index: 0, kind: input, shape index: {}]
  %s1 = inlined_call_operand.vmem [shape: f32[8,32], index: 1, kind: input, shape index: {}]
  %s2 = inlined_call_operand.vmem [shape: f32[32,8], index: 2, kind: input, shape index: {}]
  %s3 = inlined_call_operand.hbm [shape: f32[512,256], index: 3, kind: input, shape index: {}]
  %s4 = inlined_call_operand.<no memory space> [shape: f32[1], index: 4, kind: input, shape index: {}]
  %s5 = inlined_call_operand.hbm [shape: f32[2,32,256], index: 5, kind: output, shape index: {}]
  %s6 = sld [smem:[#allocation0]]
  $region61: #{tpu_custom_call.1} parent=0
    _
  %s8 = ssub.s32 1, %s6
  %s9 = scalar_select 0, %s8, %s6
  %10 = sst [smem:[#allocation2]] %s4
  $region1: #{tpu_custom_call.1} parent=0
    #allocation3 [shape = 'u8[65536]{0}', space=vmem, size = 0x10000, scoped, tag = 'input window, operand 0']
    #allocation4 [shape = 's32[2]{0}', space=sflag, size = 0x8, scoped, tag = 'scoped memory for tpu_custom_call.1']
    #allocation5 [shape = 's32[2]{0}', space=sflag, size = 0x8, scoped, tag = 'scoped memory for tpu_custom_call.1']
    #allocation6 [shape = 'u8[524288]{0}', space=vmem, size = 0x80000, scoped, tag = 'input window, operand 3, single buffered']
    #allocation7 [shape = 's32[1]{0}', space=sflag, size = 0x4, scoped, tag = 'scoped memory for tpu_custom_call.1']
    #allocation8 [shape = 'u8[65536]{0}', space=vmem, size = 0x10000, scoped, tag = 'output window, operand 0']
    %11 = vsyncpa [#allocation4], 0
    %s12 = scalar_lea.sflag [#allocation4], 1
    %13 = vsyncpa %s12, 0
    %14 = vsyncpa [#allocation7], 0
    %15 = vsyncpa [#allocation5], 0
    %s16 = scalar_lea.sflag [#allocation5], 1
    %17 = vsyncpa %s16, 0
    loop: start=0, step=1, limit=4
    $region2: #{tpu_custom_call.1} parent=1 // loop_pre_header
      _
    $region3: #{tpu_custom_call.1} parent=1 // loop_header
      %s19 = sphi 0, %s23
      %p20 = scmp.ge.s32.totalorder %s19, 4
      %s29 = sphi 0, %s31
      %s32 = sphi 0, %s29
      %s33 = sphi 0, %s32
      %s49 = sphi 0, %s33
      %s53 = sphi 0, %s53
      %s55 = sphi 0, %s53
      %s56 = sphi 0, %s55
      %s70 = sphi 0, %s56
      %s74 = sphi 0, %s74
      %s76 = sphi 0, %s74
      %s77 = sphi 0, %s76
      %s91 = sphi 0, %s77
      %s95 = sphi 0, %s95
      %s97 = sphi 0, %s95
      %s98 = sphi 0, %s97
      %s112 = sphi 0, %s98
      %s116 = sphi 0, %s116
      %s118 = sphi 0, %s116
      %s119 = sphi 0, %s118
      %s133 = sphi 0, %s119
      %s139 = sphi 0, %s141
      %s142 = sphi 0, %s139
      %s143 = sphi 0, %s142
      %s159 = sphi 0, %s143
    $region4: #{tpu_custom_call.1} parent=1 // loop_header_branch
      %22 = sbr.rel (%p20) target = $region8
    $region5: #{tpu_custom_call.1} parent=1 // loop_body
      %s24 = ssub.s32 %s19, 1
      %s25 = ssub.s32 %s19, 2
      %s26 = sadd.s32 %s19, 1
      %s27 = ssub.s32 %s19, %s26
      %p28 = scmp.eq.s32.totalorder %s27, 0
      %s30 = sadd.s32 %s29, 1
      %s31 = scalar_select %p28, %s29, %s30
      %p34 = pneg %p28
      %p35 = scmp.eq.s32.totalorder %s19, 1
      %p36 = por %p34, %p35
      %p37 = scmp.ne.s32.totalorder %s29, %s32
      %p38 = scmp.eq.s32.totalorder %s19, 0
      %p39 = por %p37, %p38
      %p40 = scmp.ne.s32.totalorder %s29, %s32
      %p41 = scmp.eq.s32.totalorder %s24, 1
      %p42 = por %p40, %p41
      %p43 = scmp.ne.s32.totalorder %s32, %s33
      %p44 = scmp.eq.s32.totalorder %s24, 0
      %p45 = por %p43, %p44
      %p46 = scmp.ne.s32.totalorder %s32, %s33
      %p47 = scmp.eq.s32.totalorder %s25, 1
      %p48 = por %p46, %p47
      %p50 = scmp.ne.s32.totalorder %s33, %s49
      %p51 = scmp.eq.s32.totalorder %s25, 0
      %p52 = por %p50, %p51
      %s54 = sadd.s32 %s53, 1
      %p57 = scmp.eq.s32.totalorder %s19, 1
      %p58 = scmp.ne.s32.totalorder %s53, %s55
      %p59 = scmp.eq.s32.totalorder %s19, 0
      %p60 = por %p58, %p59
      %p61 = scmp.ne.s32.totalorder %s53, %s55
      %p62 = scmp.eq.s32.totalorder %s24, 1
      %p63 = por %p61, %p62
      %p64 = scmp.ne.s32.totalorder %s55, %s56
      %p65 = scmp.eq.s32.totalorder %s24, 0
      %p66 = por %p64, %p65
      %p67 = scmp.ne.s32.totalorder %s55, %s56
      %p68 = scmp.eq.s32.totalorder %s25, 1
      %p69 = por %p67, %p68
      %p71 = scmp.ne.s32.totalorder %s56, %s70
      %p72 = scmp.eq.s32.totalorder %s25, 0
      %p73 = por %p71, %p72
      %s75 = sadd.s32 %s74, 1
      %p78 = scmp.eq.s32.totalorder %s19, 1
      %p79 = scmp.ne.s32.totalorder %s74, %s76
      %p80 = scmp.eq.s32.totalorder %s19, 0
      %p81 = por %p79, %p80
      %p82 = scmp.ne.s32.totalorder %s74, %s76
      %p83 = scmp.eq.s32.totalorder %s24, 1
      %p84 = por %p82, %p83
      %p85 = scmp.ne.s32.totalorder %s76, %s77
      %p86 = scmp.eq.s32.totalorder %s24, 0
      %p87 = por %p85, %p86
      %p88 = scmp.ne.s32.totalorder %s76, %s77
      %p89 = scmp.eq.s32.totalorder %s25, 1
      %p90 = por %p88, %p89
      %p92 = scmp.ne.s32.totalorder %s77, %s91
      %p93 = scmp.eq.s32.totalorder %s25, 0
      %p94 = por %p92, %p93
      %s96 = sadd.s32 %s95, 1
      %p99 = scmp.eq.s32.totalorder %s19, 1
      %p100 = scmp.ne.s32.totalorder %s95, %s97
      %p101 = scmp.eq.s32.totalorder %s19, 0
      %p102 = por %p100, %p101
      %p103 = scmp.ne.s32.totalorder %s95, %s97
      %p104 = scmp.eq.s32.totalorder %s24, 1
      %p105 = por %p103, %p104
      %p106 = scmp.ne.s32.totalorder %s97, %s98
      %p107 = scmp.eq.s32.totalorder %s24, 0
      %p108 = por %p106, %p107
      %p109 = scmp.ne.s32.totalorder %s97, %s98
      %p110 = scmp.eq.s32.totalorder %s25, 1
      %p111 = por %p109, %p110
      %p113 = scmp.ne.s32.totalorder %s98, %s112
      %p114 = scmp.eq.s32.totalorder %s25, 0
      %p115 = por %p113, %p114
      %s117 = sadd.s32 %s116, 1
      %p120 = scmp.eq.s32.totalorder %s19, 1
      %p121 = scmp.ne.s32.totalorder %s116, %s118
      %p122 = scmp.eq.s32.totalorder %s19, 0
      %p123 = por %p121, %p122
      %p124 = scmp.ne.s32.totalorder %s116, %s118
      %p125 = scmp.eq.s32.totalorder %s24, 1
      %p126 = por %p124, %p125
      %p127 = scmp.ne.s32.totalorder %s118, %s119
      %p128 = scmp.eq.s32.totalorder %s24, 0
      %p129 = por %p127, %p128
      %p130 = scmp.ne.s32.totalorder %s118, %s119
      %p131 = scmp.eq.s32.totalorder %s25, 1
      %p132 = por %p130, %p131
      %p134 = scmp.ne.s32.totalorder %s119, %s133
      %p135 = scmp.eq.s32.totalorder %s25, 0
      %p136 = por %p134, %p135
      %s137 = ssub.s32 %s19, %s26
      %p138 = scmp.eq.s32.totalorder %s137, 0
      %s140 = sadd.s32 %s139, 1
      %s141 = scalar_select %p138, %s139, %s140
      %p144 = pneg %p138
      %p145 = scmp.eq.s32.totalorder %s19, 1
      %p146 = por %p144, %p145
      %p147 = scmp.ne.s32.totalorder %s139, %s142
      %p148 = scmp.eq.s32.totalorder %s19, 0
      %p149 = por %p147, %p148
      %p150 = scmp.ne.s32.totalorder %s139, %s142
      %p151 = scmp.eq.s32.totalorder %s24, 1
      %p152 = por %p150, %p151
      %p153 = scmp.ne.s32.totalorder %s142, %s143
      %p154 = scmp.eq.s32.totalorder %s24, 0
      %p155 = por %p153, %p154
      %p156 = scmp.ne.s32.totalorder %s142, %s143
      %p157 = scmp.eq.s32.totalorder %s25, 1
      %p158 = por %p156, %p157
      %p160 = scmp.ne.s32.totalorder %s143, %s159
      %p161 = scmp.eq.s32.totalorder %s25, 0
      %p162 = por %p160, %p161
      %p163 = scmp.le.s32.totalorder 1, %s19
      %p164 = scmp.lt.s32.totalorder %s19, 3
      %p165 = pnand %p163, %p164
      %p166 = pneg %p165
      // Predicated region
      $region9: #{tpu_custom_call.1} parent=5 // pred_check
        _
      $region10: #{tpu_custom_call.1} parent=5 // pred_check_branch
        %168 = sbr.rel (%p165) target = $region12
      $region11: #{tpu_custom_call.1} parent=5 // pred_region
        %s169 = ssub.s32 %s19, 1
        // Predicated region
        $region13: #{tpu_custom_call.1} parent=11 // pred_check
          %p170 = pneg %p66
        $region14: #{tpu_custom_call.1} parent=11 // pred_check_branch
          %172 = sbr.rel (%p170) target = $region16
        $region15: #{tpu_custom_call.1} parent=11 // pred_region
          _
        $region16: #{tpu_custom_call.1} parent=11 // pred_fallthru
          _
        // Predicated region
        $region17: #{tpu_custom_call.1} parent=11 // pred_check
          %p173 = pneg %p87
        $region18: #{tpu_custom_call.1} parent=11 // pred_check_branch
          %175 = sbr.rel (%p173) target = $region20
        $region19: #{tpu_custom_call.1} parent=11 // pred_region
          _
        $region20: #{tpu_custom_call.1} parent=11 // pred_fallthru
          _
        // Predicated region
        $region21: #{tpu_custom_call.1} parent=11 // pred_check
          %p176 = pneg %p108
        $region22: #{tpu_custom_call.1} parent=11 // pred_check_branch
          %178 = sbr.rel (%p176) target = $region24
        $region23: #{tpu_custom_call.1} parent=11 // pred_region
          %s180 = ssub.s32 16384, 16384
          %181 = vsyncadd [#allocation7], %s180
          %s182 = sshll.u32 [#allocation6], 4
          %s183 = int_to_ptr.vmem [resolvable:$true] %s182
          %188 = dma.hbm_to_vmem [thread:$0]  %s3, 16384, %s183, [#allocation7], 256, 256, 16
        $region24: #{tpu_custom_call.1} parent=11 // pred_fallthru
          _
        // Predicated region
        $region25: #{tpu_custom_call.1} parent=11 // pred_check
          %p189 = pneg %p129
        $region26: #{tpu_custom_call.1} parent=11 // pred_check_branch
          %191 = sbr.rel (%p189) target = $region28
        $region27: #{tpu_custom_call.1} parent=11 // pred_region
          _
        $region28: #{tpu_custom_call.1} parent=11 // pred_fallthru
          _
      $region12: #{tpu_custom_call.1} parent=5 // pred_fallthru
        _
      %p192 = scmp.lt.s32.totalorder %s19, 2
      // Predicated region
      $region29: #{tpu_custom_call.1} parent=5 // pred_check
        %p193 = pneg %p192
      $region30: #{tpu_custom_call.1} parent=5 // pred_check_branch
        %195 = sbr.rel (%p193) target = $region32
      $region31: #{tpu_custom_call.1} parent=5 // pred_region
        // Predicated region
        $region33: #{tpu_custom_call.1} parent=31 // pred_check
          %p196 = pneg %p39
        $region34: #{tpu_custom_call.1} parent=31 // pred_check_branch
          %198 = sbr.rel (%p196) target = $region36
        $region35: #{tpu_custom_call.1} parent=31 // pred_region
          %s199 = sand.u32 %s29, 1
          %s200 = scalar_lea.sflag [#allocation4], %s199
          %s201 = sand.u32 %s29, 1
          %s202 = smul.addr %s201, 64
          %s203 = scalar_lea.vmem [#allocation3], %s202
          %s205 = ssub.s32 1024, 1024
          %206 = vsyncadd %s200, %s205
          %s207 = smul.addr %s19, 8
          %s208 = smul.addr %s207, 128
          %s209 = scalar_lea.hbm %s0, %s208
          %s210 = sshll.u32 %s203, 4
          %s211 = int_to_ptr.vmem [resolvable:$true] %s210
          %216 = dma.hbm_to_vmem [thread:$0]  %s209, 1024, %s211, %s200, 256, 256, 16
        $region36: #{tpu_custom_call.1} parent=31 // pred_fallthru
          _
      $region32: #{tpu_custom_call.1} parent=5 // pred_fallthru
        _
      %p217 = scmp.le.s32.totalorder 1, %s19
      %p218 = scmp.lt.s32.totalorder %s19, 3
      %p219 = pnand %p217, %p218
      %p220 = pneg %p219
      // Predicated region
      $region37: #{tpu_custom_call.1} parent=5 // pred_check
        _
      $region38: #{tpu_custom_call.1} parent=5 // pred_check_branch
        %222 = sbr.rel (%p219) target = $region40
      $region39: #{tpu_custom_call.1} parent=5 // pred_region
        %s223 = ssub.s32 %s19, 1
        %s224 = sand.u32 %s32, 1
        %s225 = scalar_lea.sflag [#allocation4], %s224
        %s226 = sand.u32 %s32, 1
        %s227 = smul.addr %s226, 64
        %s228 = scalar_lea.vmem [#allocation3], %s227
        // Predicated region
        $region41: #{tpu_custom_call.1} parent=39 // pred_check
          %p229 = pneg %p45
        $region42: #{tpu_custom_call.1} parent=39 // pred_check_branch
          %231 = sbr.rel (%p229) target = $region44
        $region43: #{tpu_custom_call.1} parent=39 // pred_region
          %232 = dma.done %s225, 1024
        $region44: #{tpu_custom_call.1} parent=39 // pred_fallthru
          _
        // Predicated region
        $region45: #{tpu_custom_call.1} parent=39 // pred_check
          %p233 = pneg %p108
        $region46: #{tpu_custom_call.1} parent=39 // pred_check_branch
          %235 = sbr.rel (%p233) target = $region48
        $region47: #{tpu_custom_call.1} parent=39 // pred_region
          %236 = dma.done [#allocation7], 16384
        $region48: #{tpu_custom_call.1} parent=39 // pred_fallthru
          _
        %s237 = sand.u32 %s32, 1
        %s238 = scalar_lea.sflag [#allocation4], %s237
        %s239 = sand.u32 %s32, 1
        %s240 = smul.addr %s239, 64
        %s241 = scalar_lea.vmem [#allocation3], %s240
        %p242 = pneg %p45
        %p243 = pneg %p42
        %p244 = pneg %p66
        %p245 = pneg %p63
        %p246 = pneg %p87
        %p247 = pneg %p84
        %p248 = pneg %p108
        %p249 = pneg %p105
        %p250 = pneg %p129
        %p251 = pneg %p126
        %p252 = pneg %p155
        %p253 = pneg %p152
        %s254 = sand.u32 %s142, 1
        %s255 = scalar_lea.sflag [#allocation5], %s254
        %s256 = sand.u32 %s142, 1
        %s257 = smul.addr %s256, 64
        %s258 = scalar_lea.vmem [#allocation8], %s257
        %v259 = vld [vmem:[%s1] sm:$0xff]
        %v260 = vld [vmem:[%s2] sm:$0xff]
        %v261 = vld [vmem:[%s2 + $0x8] sm:$0xff]
        %v262 = vld [vmem:[%s2 + $0x10] sm:$0xff]
        %v263 = vld [vmem:[%s2 + $0x18] sm:$0xff]
        %v264 = vld [vmem:[#allocation6] sm:$0xff]
        %v265 = vld [vmem:[#allocation6 + $0x8] sm:$0xff]
        %v266 = vld [vmem:[#allocation6 + $0x10] sm:$0xff]
        %v267 = vld [vmem:[#allocation6 + $0x18] sm:$0xff]
        %v268 = vld [vmem:[#allocation6 + $0x20] sm:$0xff]
        %v269 = vld [vmem:[#allocation6 + $0x28] sm:$0xff]
        %v270 = vld [vmem:[#allocation6 + $0x30] sm:$0xff]
        %v271 = vld [vmem:[#allocation6 + $0x38] sm:$0xff]
        %v272 = vld [vmem:[#allocation6 + $0x40] sm:$0xff]
        %v273 = vld [vmem:[#allocation6 + $0x48] sm:$0xff]
        %v274 = vld [vmem:[#allocation6 + $0x50] sm:$0xff]
        %v275 = vld [vmem:[#allocation6 + $0x58] sm:$0xff]
        %v276 = vld [vmem:[#allocation6 + $0x60] sm:$0xff]
        %v277 = vld [vmem:[#allocation6 + $0x68] sm:$0xff]
        %v278 = vld [vmem:[#allocation6 + $0x70] sm:$0xff]
        %v279 = vld [vmem:[#allocation6 + $0x78] sm:$0xff]
        %v280 = vld [vmem:[#allocation6 + $0x80] sm:$0xff]
        %v281 = vld [vmem:[#allocation6 + $0x88] sm:$0xff]
        %v282 = vld [vmem:[#allocation6 + $0x90] sm:$0xff]
        %v283 = vld [vmem:[#allocation6 + $0x98] sm:$0xff]
        %v284 = vld [vmem:[#allocation6 + $0xa0] sm:$0xff]
        %v285 = vld [vmem:[#allocation6 + $0xa8] sm:$0xff]
        %v286 = vld [vmem:[#allocation6 + $0xb0] sm:$0xff]
        %v287 = vld [vmem:[#allocation6 + $0xb8] sm:$0xff]
        %v288 = vld [vmem:[#allocation6 + $0xc0] sm:$0xff]
        %v289 = vld [vmem:[#allocation6 + $0xc8] sm:$0xff]
        %v290 = vld [vmem:[#allocation6 + $0xd0] sm:$0xff]
        %v291 = vld [vmem:[#allocation6 + $0xd8] sm:$0xff]
        %v292 = vld [vmem:[#allocation6 + $0xe0] sm:$0xff]
        %v293 = vld [vmem:[#allocation6 + $0xe8] sm:$0xff]
        %v294 = vld [vmem:[#allocation6 + $0xf0] sm:$0xff]
        %v295 = vld [vmem:[#allocation6 + $0xf8] sm:$0xff]
        %v296 = vld [vmem:[#allocation6 + $0x100] sm:$0xff]
        %v297 = vld [vmem:[#allocation6 + $0x108] sm:$0xff]
        %v298 = vld [vmem:[#allocation6 + $0x110] sm:$0xff]
        %v299 = vld [vmem:[#allocation6 + $0x118] sm:$0xff]
        %v300 = vld [vmem:[#allocation6 + $0x120] sm:$0xff]
        %v301 = vld [vmem:[#allocation6 + $0x128] sm:$0xff]
        %v302 = vld [vmem:[#allocation6 + $0x130] sm:$0xff]
        %v303 = vld [vmem:[#allocation6 + $0x138] sm:$0xff]
        %v304 = vld [vmem:[#allocation6 + $0x140] sm:$0xff]
        %v305 = vld [vmem:[#allocation6 + $0x148] sm:$0xff]
        %v306 = vld [vmem:[#allocation6 + $0x150] sm:$0xff]
        %v307 = vld [vmem:[#allocation6 + $0x158] sm:$0xff]
        %v308 = vld [vmem:[#allocation6 + $0x160] sm:$0xff]
        %v309 = vld [vmem:[#allocation6 + $0x168] sm:$0xff]
        %v310 = vld [vmem:[#allocation6 + $0x170] sm:$0xff]
        %v311 = vld [vmem:[#allocation6 + $0x178] sm:$0xff]
        %v312 = vld [vmem:[#allocation6 + $0x180] sm:$0xff]
        %v313 = vld [vmem:[#allocation6 + $0x188] sm:$0xff]
        %v314 = vld [vmem:[#allocation6 + $0x190] sm:$0xff]
        %v315 = vld [vmem:[#allocation6 + $0x198] sm:$0xff]
        %v316 = vld [vmem:[#allocation6 + $0x1a0] sm:$0xff]
        %v317 = vld [vmem:[#allocation6 + $0x1a8] sm:$0xff]
        %v318 = vld [vmem:[#allocation6 + $0x1b0] sm:$0xff]
        %v319 = vld [vmem:[#allocation6 + $0x1b8] sm:$0xff]
        %v320 = vld [vmem:[#allocation6 + $0x1c0] sm:$0xff]
        %v321 = vld [vmem:[#allocation6 + $0x1c8] sm:$0xff]
        %v322 = vld [vmem:[#allocation6 + $0x1d0] sm:$0xff]
        %v323 = vld [vmem:[#allocation6 + $0x1d8] sm:$0xff]
        %v324 = vld [vmem:[#allocation6 + $0x1e0] sm:$0xff]
        %v325 = vld [vmem:[#allocation6 + $0x1e8] sm:$0xff]
        %v326 = vld [vmem:[#allocation6 + $0x1f0] sm:$0xff]
        %v327 = vld [vmem:[#allocation6 + $0x1f8] sm:$0xff]
        %v328 = vld [vmem:[#allocation6 + $0x200] sm:$0xff]
        %v329 = vld [vmem:[#allocation6 + $0x208] sm:$0xff]
        %v330 = vld [vmem:[#allocation6 + $0x210] sm:$0xff]
        %v331 = vld [vmem:[#allocation6 + $0x218] sm:$0xff]
        %v332 = vld [vmem:[#allocation6 + $0x220] sm:$0xff]
        %v333 = vld [vmem:[#allocation6 + $0x228] sm:$0xff]
        %v334 = vld [vmem:[#allocation6 + $0x230] sm:$0xff]
        %v335 = vld [vmem:[#allocation6 + $0x238] sm:$0xff]
        %v336 = vld [vmem:[#allocation6 + $0x240] sm:$0xff]
        %v337 = vld [vmem:[#allocation6 + $0x248] sm:$0xff]
        %v338 = vld [vmem:[#allocation6 + $0x250] sm:$0xff]
        %v339 = vld [vmem:[#allocation6 + $0x258] sm:$0xff]
        %v340 = vld [vmem:[#allocation6 + $0x260] sm:$0xff]
        %v341 = vld [vmem:[#allocation6 + $0x268] sm:$0xff]
        %v342 = vld [vmem:[#allocation6 + $0x270] sm:$0xff]
        %v343 = vld [vmem:[#allocation6 + $0x278] sm:$0xff]
        %v344 = vld [vmem:[#allocation6 + $0x280] sm:$0xff]
        %v345 = vld [vmem:[#allocation6 + $0x288] sm:$0xff]
        %v346 = vld [vmem:[#allocation6 + $0x290] sm:$0xff]
        %v347 = vld [vmem:[#allocation6 + $0x298] sm:$0xff]
        %v348 = vld [vmem:[#allocation6 + $0x2a0] sm:$0xff]
        %v349 = vld [vmem:[#allocation6 + $0x2a8] sm:$0xff]
        %v350 = vld [vmem:[#allocation6 + $0x2b0] sm:$0xff]
        %v351 = vld [vmem:[#allocation6 + $0x2b8] sm:$0xff]
        %v352 = vld [vmem:[#allocation6 + $0x2c0] sm:$0xff]
        %v353 = vld [vmem:[#allocation6 + $0x2c8] sm:$0xff]
        %v354 = vld [vmem:[#allocation6 + $0x2d0] sm:$0xff]
        %v355 = vld [vmem:[#allocation6 + $0x2d8] sm:$0xff]
        %v356 = vld [vmem:[#allocation6 + $0x2e0] sm:$0xff]
        %v357 = vld [vmem:[#allocation6 + $0x2e8] sm:$0xff]
        %v358 = vld [vmem:[#allocation6 + $0x2f0] sm:$0xff]
        %v359 = vld [vmem:[#allocation6 + $0x2f8] sm:$0xff]
        %v360 = vld [vmem:[#allocation6 + $0x300] sm:$0xff]
        %v361 = vld [vmem:[#allocation6 + $0x308] sm:$0xff]
        %v362 = vld [vmem:[#allocation6 + $0x310] sm:$0xff]
        %v363 = vld [vmem:[#allocation6 + $0x318] sm:$0xff]
        %v364 = vld [vmem:[#allocation6 + $0x320] sm:$0xff]
        %v365 = vld [vmem:[#allocation6 + $0x328] sm:$0xff]
        %v366 = vld [vmem:[#allocation6 + $0x330] sm:$0xff]
        %v367 = vld [vmem:[#allocation6 + $0x338] sm:$0xff]
        %v368 = vld [vmem:[#allocation6 + $0x340] sm:$0xff]
        %v369 = vld [vmem:[#allocation6 + $0x348] sm:$0xff]
        %v370 = vld [vmem:[#allocation6 + $0x350] sm:$0xff]
        %v371 = vld [vmem:[#allocation6 + $0x358] sm:$0xff]
        %v372 = vld [vmem:[#allocation6 + $0x360] sm:$0xff]
        %v373 = vld [vmem:[#allocation6 + $0x368] sm:$0xff]
        %v374 = vld [vmem:[#allocation6 + $0x370] sm:$0xff]
        %v375 = vld [vmem:[#allocation6 + $0x378] sm:$0xff]
        %v376 = vld [vmem:[#allocation6 + $0x380] sm:$0xff]
        %v377 = vld [vmem:[#allocation6 + $0x388] sm:$0xff]
        %v378 = vld [vmem:[#allocation6 + $0x390] sm:$0xff]
        %v379 = vld [vmem:[#allocation6 + $0x398] sm:$0xff]
        %v380 = vld [vmem:[#allocation6 + $0x3a0] sm:$0xff]
        %v381 = vld [vmem:[#allocation6 + $0x3a8] sm:$0xff]
        %v382 = vld [vmem:[#allocation6 + $0x3b0] sm:$0xff]
        %v383 = vld [vmem:[#allocation6 + $0x3b8] sm:$0xff]
        %v384 = vld [vmem:[#allocation6 + $0x3c0] sm:$0xff]
        %v385 = vld [vmem:[#allocation6 + $0x3c8] sm:$0xff]
        %v386 = vld [vmem:[#allocation6 + $0x3d0] sm:$0xff]
        %v387 = vld [vmem:[#allocation6 + $0x3d8] sm:$0xff]
        %v388 = vld [vmem:[#allocation6 + $0x3e0] sm:$0xff]
        %v389 = vld [vmem:[#allocation6 + $0x3e8] sm:$0xff]
        %v390 = vld [vmem:[#allocation6 + $0x3f0] sm:$0xff]
        %v391 = vld [vmem:[#allocation6 + $0x3f8] sm:$0xff]
        %s392 = sld [smem:[#allocation2]]
        %v393 = vld [vmem:[%s228] sm:$0xff]
        %v394 = vld [vmem:[%s228 + $0x8] sm:$0xff]
        %v395 = vld [vmem:[%s228 + $0x10] sm:$0xff]
        %v396 = vld [vmem:[%s228 + $0x18] sm:$0xff]
        %v397 = vld [vmem:[%s228 + $0x20] sm:$0xff]
        %v398 = vld [vmem:[%s228 + $0x28] sm:$0xff]
        %v399 = vld [vmem:[%s228 + $0x30] sm:$0xff]
        %v400 = vld [vmem:[%s228 + $0x38] sm:$0xff]
        %v401 = vmax.f32 %v393, %v394
        %402 = vmax.xlane.f32.xlu0 %v401
        %v403 = vpop.xlane.xlu0 %402
        %v404 = vmax.f32 %v395, %v396
        %405 = vmax.xlane.f32.xlu0 %v404
        %v406 = vpop.xlane.xlu0 %405
        %v407 = vmax.f32 %v397, %v398
        %408 = vmax.xlane.f32.xlu0 %v407
        %v409 = vpop.xlane.xlu0 %408
        %v410 = vmax.f32 %v399, %v400
        %411 = vmax.xlane.f32.xlu0 %v410
        %v412 = vpop.xlane.xlu0 %411
        %v413 = vadd.f32 %v393, %v394
        %414 = vadd.xlane.f32.xlu0 %v413
        %v415 = vpop.xlane.xlu0 %414
        %v416 = vadd.f32 %v395, %v396
        %417 = vadd.xlane.f32.xlu0 %v416
        %v418 = vpop.xlane.xlu0 %417
        %v419 = vadd.f32 %v397, %v398
        %420 = vadd.xlane.f32.xlu0 %v419
        %v421 = vpop.xlane.xlu0 %420
        %v422 = vadd.f32 %v399, %v400
        %423 = vadd.xlane.f32.xlu0 %v422
        %v424 = vpop.xlane.xlu0 %423
        %v425 = vrcp.pop 256.0
        %v426 = vmul.f32 %v415, %v425
        %v427 = vmul.f32 %v418, %v425
        %v428 = vmul.f32 %v421, %v425
        %v429 = vmul.f32 %v424, %v425
        %vm430 = vcmask 7168
        %v431 = vsel %vm430, %v403, %v426
        %v432 = vsel %vm430, %v406, %v427
        %v433 = vsel %vm430, %v409, %v428
        %v434 = vsel %vm430, %v412, %v429
        %vm435 = vcmask 261120
        %v437 = vsel %vm435, %v259, 0
        %439 = vmatprep.subr.mxu0 0.0
        %440 = vmatpush1.msra.mxu0 %v431
        %441 = vmatprep.subr.mxu0 0.0
        %442 = vmatpush1.msra.mxu0 %v432
        %443 = vmatprep.subr.mxu0 0.0
        %444 = vmatpush1.msra.mxu0 %v433
        %445 = vmatprep.subr.mxu0 0.0
        %446 = vmatpush1.msra.mxu0 %v434
        %447 = vmatprep.subr.mxu0 0.0
        %448 = vmatpush1.msra.mxu0 0.0
        %449 = vmatprep.subr.mxu0 0.0
        %450 = vmatpush1.msra.mxu0 0.0
        %451 = vmatprep.subr.mxu0 0.0
        %452 = vmatpush1.msra.mxu0 0.0
        %453 = vmatprep.subr.mxu0 0.0
        %454 = vmatpush1.msra.mxu0 0.0
        %455 = vmatprep.subr.mxu0 0.0
        %456 = vmatpush1.msra.mxu0 0.0
        %457 = vmatprep.subr.mxu0 0.0
        %458 = vmatpush1.msra.mxu0 0.0
        %459 = vmatprep.subr.mxu0 0.0
        %460 = vmatpush1.msra.mxu0 0.0
        %461 = vmatprep.subr.mxu0 0.0
        %462 = vmatpush1.msra.mxu0 0.0
        %463 = vmatprep.subr.mxu0 0.0
        %464 = vmatpush1.msra.mxu0 0.0
        %465 = vmatprep.subr.mxu0 0.0
        %466 = vmatpush1.msra.mxu0 0.0
        %467 = vmatprep.subr.mxu0 0.0
        %468 = vmatpush1.msra.mxu0 0.0
        %469 = vmatprep.subr.mxu0 0.0
        %470 = vmatpush1.msra.mxu0 0.0
        %471 = vmatprep.subr.mxu0 0.0
        %472 = vmatpush1.msra.mxu0 0.0
        %473 = vmatprep.subr.mxu0 0.0
        %474 = vmatpush1.msra.mxu0 0.0
        %475 = vmatprep.subr.mxu0 0.0
        %476 = vmatpush1.msra.mxu0 0.0
        %477 = vmatprep.subr.mxu0 0.0
        %478 = vmatpush1.msra.mxu0 0.0
        %479 = vmatprep.subr.mxu0 0.0
        %480 = vmatpush1.msra.mxu0 0.0
        %481 = vmatprep.subr.mxu0 0.0
        %482 = vmatpush1.msra.mxu0 0.0
        %483 = vmatprep.subr.mxu0 0.0
        %484 = vmatpush1.msra.mxu0 0.0
        %485 = vmatprep.subr.mxu0 0.0
        %486 = vmatpush1.msra.mxu0 0.0
        %487 = vmatprep.subr.mxu0 0.0
        %488 = vmatpush1.msra.mxu0 0.0
        %489 = vmatprep.subr.mxu0 0.0
        %490 = vmatpush1.msra.mxu0 0.0
        %491 = vmatprep.subr.mxu0 0.0
        %492 = vmatpush1.msra.mxu0 0.0
        %493 = vmatprep.subr.mxu0 0.0
        %494 = vmatpush1.msra.mxu0 0.0
        %495 = vmatprep.subr.mxu0 0.0
        %496 = vmatpush1.msra.mxu0 0.0
        %497 = vmatprep.subr.mxu0 0.0
        %498 = vmatpush1.msra.mxu0 0.0
        %499 = vmatprep.subr.mxu0 0.0
        %500 = vmatpush1.msra.mxu0 0.0
        %501 = vmatprep.subr.mxu0 0.0
        %502 = vmatpush1.msra.mxu0 0.0
        %503 = vmatprep.mubr.f32.mxu0 0.0
        %504 = vmatmul.mubr.f32.gmra.mrb[0].mxu0 %v437
        %v505 = vpop.f32.mrb[0].mxu0
        %v506 = vadd.f32 0.0, %v505
        %v507 = vpop.f32.mrb[0].mxu0
        %508 = vdwg.mxu0
        %v509 = vmax.f32 %v506, 0.0
        %vm510 = vcmask 64512
        %v512 = vsel %vm510, %v260, 0
        %v515 = vsel %vm510, %v261, 0
        %v518 = vsel %vm510, %v262, 0
        %v521 = vsel %vm510, %v263, 0
        %523 = vmatprep.subr.mxu0 0.0
        %524 = vmatpush1.msra.mxu0 %v509
        %525 = vmatprep.subr.mxu0 0.0
        %526 = vmatpush1.msra.mxu0 0.0
        %527 = vmatprep.subr.mxu0 0.0
        %528 = vmatpush1.msra.mxu0 0.0
        %529 = vmatprep.subr.mxu0 0.0
        %530 = vmatpush1.msra.mxu0 0.0
        %531 = vmatprep.subr.mxu0 0.0
        %532 = vmatpush1.msra.mxu0 0.0
        %533 = vmatprep.subr.mxu0 0.0
        %534 = vmatpush1.msra.mxu0 0.0
        %535 = vmatprep.subr.mxu0 0.0
        %536 = vmatpush1.msra.mxu0 0.0
        %537 = vmatprep.subr.mxu0 0.0
        %538 = vmatpush1.msra.mxu0 0.0
        %539 = vmatprep.subr.mxu0 0.0
        %540 = vmatpush1.msra.mxu0 0.0
        %541 = vmatprep.subr.mxu0 0.0
        %542 = vmatpush1.msra.mxu0 0.0
        %543 = vmatprep.subr.mxu0 0.0
        %544 = vmatpush1.msra.mxu0 0.0
        %545 = vmatprep.subr.mxu0 0.0
        %546 = vmatpush1.msra.mxu0 0.0
        %547 = vmatprep.subr.mxu0 0.0
        %548 = vmatpush1.msra.mxu0 0.0
        %549 = vmatprep.subr.mxu0 0.0
        %550 = vmatpush1.msra.mxu0 0.0
        %551 = vmatprep.subr.mxu0 0.0
        %552 = vmatpush1.msra.mxu0 0.0
        %553 = vmatprep.subr.mxu0 0.0
        %554 = vmatpush1.msra.mxu0 0.0
        %555 = vmatprep.subr.mxu0 0.0
        %556 = vmatpush1.msra.mxu0 0.0
        %557 = vmatprep.subr.mxu0 0.0
        %558 = vmatpush1.msra.mxu0 0.0
        %559 = vmatprep.subr.mxu0 0.0
        %560 = vmatpush1.msra.mxu0 0.0
        %561 = vmatprep.subr.mxu0 0.0
        %562 = vmatpush1.msra.mxu0 0.0
        %563 = vmatprep.subr.mxu0 0.0
        %564 = vmatpush1.msra.mxu0 0.0
        %565 = vmatprep.subr.mxu0 0.0
        %566 = vmatpush1.msra.mxu0 0.0
        %567 = vmatprep.subr.mxu0 0.0
        %568 = vmatpush1.msra.mxu0 0.0
        %569 = vmatprep.subr.mxu0 0.0
        %570 = vmatpush1.msra.mxu0 0.0
        %571 = vmatprep.subr.mxu0 0.0
        %572 = vmatpush1.msra.mxu0 0.0
        %573 = vmatprep.subr.mxu0 0.0
        %574 = vmatpush1.msra.mxu0 0.0
        %575 = vmatprep.subr.mxu0 0.0
        %576 = vmatpush1.msra.mxu0 0.0
        %577 = vmatprep.subr.mxu0 0.0
        %578 = vmatpush1.msra.mxu0 0.0
        %579 = vmatprep.subr.mxu0 0.0
        %580 = vmatpush1.msra.mxu0 0.0
        %581 = vmatprep.subr.mxu0 0.0
        %582 = vmatpush1.msra.mxu0 0.0
        %583 = vmatprep.subr.mxu0 0.0
        %584 = vmatpush1.msra.mxu0 0.0
        %585 = vmatprep.subr.mxu0 0.0
        %586 = vmatpush1.msra.mxu0 0.0
        %587 = vmatprep.mubr.f32.mxu0 0.0
        %588 = vmatmul.mubr.f32.gmra.mrb[0].mxu0 %v512
        %v589 = vpop.f32.mrb[0].mxu0
        %v590 = vadd.f32 0.0, %v589
        %v591 = vpop.f32.mrb[0].mxu0
        %592 = vmatprep.mubr.f32.mxu0 0.0
        %593 = vmatmul.mubr.f32.gmra.mrb[0].mxu0 %v515
        %v594 = vpop.f32.mrb[0].mxu0
        %v595 = vadd.f32 0.0, %v594
        %v596 = vpop.f32.mrb[0].mxu0
        %597 = vmatprep.mubr.f32.mxu0 0.0
        %598 = vmatmul.mubr.f32.gmra.mrb[0].mxu0 %v518
        %v599 = vpop.f32.mrb[0].mxu0
        %v600 = vadd.f32 0.0, %v599
        %v601 = vpop.f32.mrb[0].mxu0
        %602 = vmatprep.mubr.f32.mxu0 0.0
        %603 = vmatmul.mubr.f32.gmra.mrb[0].mxu0 %v521
        %v604 = vpop.f32.mrb[0].mxu0
        %v605 = vadd.f32 0.0, %v604
        %v606 = vpop.f32.mrb[0].mxu0
        %607 = vdwg.mxu0
        %612 = vrot.lane.b32.xlu0 %v590, 127
        %v613 = vpop.permute.xlu0 %612
        %614 = vrot.lane.b32.xlu0 %v595, 127
        %v615 = vpop.permute.xlu0 %614
        %616 = vrot.lane.b32.xlu0 %v600, 127
        %v617 = vpop.permute.xlu0 %616
        %618 = vrot.lane.b32.xlu0 %v605, 127
        %v619 = vpop.permute.xlu0 %618
        %v624 = vadd.f32 %v590, %v613
        %v625 = vadd.f32 %v595, %v615
        %v626 = vadd.f32 %v600, %v617
        %v627 = vadd.f32 %v605, %v619
        %v628 = vxor.u32 %v624, 2147483648
        %v629 = vxor.u32 %v625, 2147483648
        %v630 = vxor.u32 %v626, 2147483648
        %v631 = vxor.u32 %v627, 2147483648
        %v632 = vmul.f32 %v628, 1.442695
        %v633 = vpow.pop %v632
        %v634 = vmul.f32 %v629, 1.442695
        %v635 = vpow.pop %v634
        %v636 = vmul.f32 %v630, 1.442695
        %v637 = vpow.pop %v636
        %v638 = vmul.f32 %v631, 1.442695
        %v639 = vpow.pop %v638
        %v640 = vadd.f32 %v633, 1.0
        %v641 = vadd.f32 %v635, 1.0
        %v642 = vadd.f32 %v637, 1.0
        %v643 = vadd.f32 %v639, 1.0
        %v644 = vrcp.pop %v640
        %v645 = vmul.f32 1.0, %v644
        %v646 = vrcp.pop %v641
        %v647 = vmul.f32 1.0, %v646
        %v648 = vrcp.pop %v642
        %v649 = vmul.f32 1.0, %v648
        %v650 = vrcp.pop %v643
        %v651 = vmul.f32 1.0, %v650
        %653 = vset.pattern.permute.xlu0 0
        %654 = vperm.xlu0 %653, %v645
        %v655 = vpop.permute.xlu0 %654
        %658 = vset.pattern.permute.xlu0 0
        %659 = vperm.xlu0 %658, %v647
        %v660 = vpop.permute.xlu0 %659
        %663 = vset.pattern.permute.xlu0 0
        %664 = vperm.xlu0 %663, %v649
        %v665 = vpop.permute.xlu0 %664
        %668 = vset.pattern.permute.xlu0 0
        %669 = vperm.xlu0 %668, %v651
        %v670 = vpop.permute.xlu0 %669
        %v672 = vmul.f32 %v393, %v655
        %v673 = vmul.f32 %v394, %v655
        %v674 = vmul.f32 %v395, %v660
        %v675 = vmul.f32 %v396, %v660
        %v676 = vmul.f32 %v397, %v665
        %v677 = vmul.f32 %v398, %v665
        %v678 = vmul.f32 %v399, %v670
        %v679 = vmul.f32 %v400, %v670
        %v680 = vmax.f32 %v672, %v676
        %v681 = vmax.f32 %v674, %v678
        %v682 = vmax.f32 %v680, %v681
        %v683 = vrot.slane %v682, 4
        %v684 = vmax.f32 %v682, %v683
        %v685 = vrot.slane %v684, 2
        %v686 = vmax.f32 %v684, %v685
        %v687 = vrot.slane %v686, 1
        %v688 = vmax.f32 %v686, %v687
        %v689 = vmax.f32 %v673, %v677
        %v690 = vmax.f32 %v675, %v679
        %v691 = vmax.f32 %v689, %v690
        %v692 = vrot.slane %v691, 4
        %v693 = vmax.f32 %v691, %v692
        %v694 = vrot.slane %v693, 2
        %v695 = vmax.f32 %v693, %v694
        %v696 = vrot.slane %v695, 1
        %v697 = vmax.f32 %v695, %v696
        %v698 = vadd.f32 %v672, %v674
        %v699 = vadd.f32 %v698, %v676
        %v700 = vadd.f32 %v699, %v678
        %v701 = vrot.slane %v700, 4
        %v702 = vadd.f32 %v700, %v701
        %v703 = vrot.slane %v702, 2
        %v704 = vadd.f32 %v702, %v703
        %v705 = vrot.slane %v704, 1
        %v706 = vadd.f32 %v704, %v705
        %v707 = vadd.f32 %v673, %v675
        %v708 = vadd.f32 %v707, %v677
        %v709 = vadd.f32 %v708, %v679
        %v710 = vrot.slane %v709, 4
        %v711 = vadd.f32 %v709, %v710
        %v712 = vrot.slane %v711, 2
        %v713 = vadd.f32 %v711, %v712
        %v714 = vrot.slane %v713, 1
        %v715 = vadd.f32 %v713, %v714
        %v716 = vrcp.pop 32.0
        %v717 = vmul.f32 %v706, %v716
        %v718 = vmul.f32 %v715, %v716
        %v719 = vstv %s392
        %720 = vmatprep.subr.mxu0 %v265
        %721 = vmatpush1.msra.mxu0 %v264
        %722 = vmatprep.subr.mxu0 %v267
        %723 = vmatpush1.msra.mxu0 %v266
        %724 = vmatprep.subr.mxu0 %v269
        %725 = vmatpush1.msra.mxu0 %v268
        %726 = vmatprep.subr.mxu0 %v271
        %727 = vmatpush1.msra.mxu0 %v270
        %728 = vmatprep.subr.mxu0 %v273
        %729 = vmatpush1.msra.mxu0 %v272
        %730 = vmatprep.subr.mxu0 %v275
        %731 = vmatpush1.msra.mxu0 %v274
        %732 = vmatprep.subr.mxu0 %v277
        %733 = vmatpush1.msra.mxu0 %v276
        %734 = vmatprep.subr.mxu0 %v279
        %735 = vmatpush1.msra.mxu0 %v278
        %736 = vmatprep.subr.mxu0 %v281
        %737 = vmatpush1.msra.mxu0 %v280
        %738 = vmatprep.subr.mxu0 %v283
        %739 = vmatpush1.msra.mxu0 %v282
        %740 = vmatprep.subr.mxu0 %v285
        %741 = vmatpush1.msra.mxu0 %v284
        %742 = vmatprep.subr.mxu0 %v287
        %743 = vmatpush1.msra.mxu0 %v286
        %744 = vmatprep.subr.mxu0 %v289
        %745 = vmatpush1.msra.mxu0 %v288
        %746 = vmatprep.subr.mxu0 %v291
        %747 = vmatpush1.msra.mxu0 %v290
        %748 = vmatprep.subr.mxu0 %v293
        %749 = vmatpush1.msra.mxu0 %v292
        %750 = vmatprep.subr.mxu0 %v295
        %751 = vmatpush1.msra.mxu0 %v294
        %752 = vmatprep.subr.mxu0 %v297
        %753 = vmatpush1.msra.mxu0 %v296
        %754 = vmatprep.subr.mxu0 %v299
        %755 = vmatpush1.msra.mxu0 %v298
        %756 = vmatprep.subr.mxu0 %v301
        %757 = vmatpush1.msra.mxu0 %v300
        %758 = vmatprep.subr.mxu0 %v303
        %759 = vmatpush1.msra.mxu0 %v302
        %760 = vmatprep.subr.mxu0 %v305
        %761 = vmatpush1.msra.mxu0 %v304
        %762 = vmatprep.subr.mxu0 %v307
        %763 = vmatpush1.msra.mxu0 %v306
        %764 = vmatprep.subr.mxu0 %v309
        %765 = vmatpush1.msra.mxu0 %v308
        %766 = vmatprep.subr.mxu0 %v311
        %767 = vmatpush1.msra.mxu0 %v310
        %768 = vmatprep.subr.mxu0 %v313
        %769 = vmatpush1.msra.mxu0 %v312
        %770 = vmatprep.subr.mxu0 %v315
        %771 = vmatpush1.msra.mxu0 %v314
        %772 = vmatprep.subr.mxu0 %v317
        %773 = vmatpush1.msra.mxu0 %v316
        %774 = vmatprep.subr.mxu0 %v319
        %775 = vmatpush1.msra.mxu0 %v318
        %776 = vmatprep.subr.mxu0 %v321
        %777 = vmatpush1.msra.mxu0 %v320
        %778 = vmatprep.subr.mxu0 %v323
        %779 = vmatpush1.msra.mxu0 %v322
        %780 = vmatprep.subr.mxu0 %v325
        %781 = vmatpush1.msra.mxu0 %v324
        %782 = vmatprep.subr.mxu0 %v327
        %783 = vmatpush1.msra.mxu0 %v326
        %784 = vmatprep.mubr.f32.mxu0 %v697
        %785 = vmatmul.mubr.f32.gmra.mrb[0].mxu0 %v688
        %v786 = vpop.f32.mrb[0].mxu0
        %v787 = vadd.f32 %v719, %v786
        %v788 = vpop.f32.mrb[0].mxu0
        %v789 = vadd.f32 %v719, %v788
        %790 = vdwg.mxu0
        %791 = vmatprep.subr.mxu0 %v329
        %792 = vmatpush1.msra.mxu0 %v328
        %793 = vmatprep.subr.mxu0 %v331
        %794 = vmatpush1.msra.mxu0 %v330
        %795 = vmatprep.subr.mxu0 %v333
        %796 = vmatpush1.msra.mxu0 %v332
        %797 = vmatprep.subr.mxu0 %v335
        %798 = vmatpush1.msra.mxu0 %v334
        %799 = vmatprep.subr.mxu0 %v337
        %800 = vmatpush1.msra.mxu0 %v336
        %801 = vmatprep.subr.mxu0 %v339
        %802 = vmatpush1.msra.mxu0 %v338
        %803 = vmatprep.subr.mxu0 %v341
        %804 = vmatpush1.msra.mxu0 %v340
        %805 = vmatprep.subr.mxu0 %v343
        %806 = vmatpush1.msra.mxu0 %v342
        %807 = vmatprep.subr.mxu0 %v345
        %808 = vmatpush1.msra.mxu0 %v344
        %809 = vmatprep.subr.mxu0 %v347
        %810 = vmatpush1.msra.mxu0 %v346
        %811 = vmatprep.subr.mxu0 %v349
        %812 = vmatpush1.msra.mxu0 %v348
        %813 = vmatprep.subr.mxu0 %v351
        %814 = vmatpush1.msra.mxu0 %v350
        %815 = vmatprep.subr.mxu0 %v353
        %816 = vmatpush1.msra.mxu0 %v352
        %817 = vmatprep.subr.mxu0 %v355
        %818 = vmatpush1.msra.mxu0 %v354
        %819 = vmatprep.subr.mxu0 %v357
        %820 = vmatpush1.msra.mxu0 %v356
        %821 = vmatprep.subr.mxu0 %v359
        %822 = vmatpush1.msra.mxu0 %v358
        %823 = vmatprep.subr.mxu0 %v361
        %824 = vmatpush1.msra.mxu0 %v360
        %825 = vmatprep.subr.mxu0 %v363
        %826 = vmatpush1.msra.mxu0 %v362
        %827 = vmatprep.subr.mxu0 %v365
        %828 = vmatpush1.msra.mxu0 %v364
        %829 = vmatprep.subr.mxu0 %v367
        %830 = vmatpush1.msra.mxu0 %v366
        %831 = vmatprep.subr.mxu0 %v369
        %832 = vmatpush1.msra.mxu0 %v368
        %833 = vmatprep.subr.mxu0 %v371
        %834 = vmatpush1.msra.mxu0 %v370
        %835 = vmatprep.subr.mxu0 %v373
        %836 = vmatpush1.msra.mxu0 %v372
        %837 = vmatprep.subr.mxu0 %v375
        %838 = vmatpush1.msra.mxu0 %v374
        %839 = vmatprep.subr.mxu0 %v377
        %840 = vmatpush1.msra.mxu0 %v376
        %841 = vmatprep.subr.mxu0 %v379
        %842 = vmatpush1.msra.mxu0 %v378
        %843 = vmatprep.subr.mxu0 %v381
        %844 = vmatpush1.msra.mxu0 %v380
        %845 = vmatprep.subr.mxu0 %v383
        %846 = vmatpush1.msra.mxu0 %v382
        %847 = vmatprep.subr.mxu0 %v385
        %848 = vmatpush1.msra.mxu0 %v384
        %849 = vmatprep.subr.mxu0 %v387
        %850 = vmatpush1.msra.mxu0 %v386
        %851 = vmatprep.subr.mxu0 %v389
        %852 = vmatpush1.msra.mxu0 %v388
        %853 = vmatprep.subr.mxu0 %v391
        %854 = vmatpush1.msra.mxu0 %v390
        %855 = vmatprep.mubr.f32.mxu0 %v718
        %856 = vmatmul.mubr.f32.gmra.mrb[0].mxu0 %v717
        %v857 = vpop.f32.mrb[0].mxu0
        %v858 = vadd.f32 %v787, %v857
        %v859 = vpop.f32.mrb[0].mxu0
        %v860 = vadd.f32 %v789, %v859
        %861 = vdwg.mxu0
        %v862 = vxor.u32 %v858, 2147483648
        %v863 = vxor.u32 %v860, 2147483648
        %v864 = vmul.f32 %v862, 1.442695
        %v865 = vpow.pop %v864
        %v866 = vmul.f32 %v863, 1.442695
        %v867 = vpow.pop %v866
        %v868 = vadd.f32 %v865, 1.0
        %v869 = vadd.f32 %v867, 1.0
        %v870 = vrcp.pop %v868
        %v871 = vmul.f32 1.0, %v870
        %v872 = vrcp.pop %v869
        %v873 = vmul.f32 1.0, %v872
        %v874 = vlaneseq
        %v875 = vshrl.u32 %v874, 7
        %v876 = vsub.s32 0, %v875
        %v877 = vrot.slane %v871, %v876
        %v878 = vlaneseq
        %v879 = vshrl.u32 %v878, 7
        %v880 = vsub.s32 0, %v879
        %v881 = vrot.slane %v873, %v880
        %v882 = vmul.f32 %v672, %v877
        %v883 = vmul.f32 %v673, %v881
        %v884 = vmul.f32 %v674, %v877
        %v885 = vmul.f32 %v675, %v881
        %v886 = vmul.f32 %v676, %v877
        %v887 = vmul.f32 %v677, %v881
        %v888 = vmul.f32 %v678, %v877
        %v889 = vmul.f32 %v679, %v881
        %v890 = vadd.f32 %v882, %v393
        %v891 = vadd.f32 %v883, %v394
        %v892 = vadd.f32 %v884, %v395
        %v893 = vadd.f32 %v885, %v396
        %v894 = vadd.f32 %v886, %v397
        %v895 = vadd.f32 %v887, %v398
        %v896 = vadd.f32 %v888, %v399
        %v897 = vadd.f32 %v889, %v400
        %898 = vst [vmem:[%s258] sm:$0xff] %v890
        %899 = vst [vmem:[%s258 + $0x8] sm:$0xff] %v891
        %900 = vst [vmem:[%s258 + $0x10] sm:$0xff] %v892
        %901 = vst [vmem:[%s258 + $0x18] sm:$0xff] %v893
        %902 = vst [vmem:[%s258 + $0x20] sm:$0xff] %v894
        %903 = vst [vmem:[%s258 + $0x28] sm:$0xff] %v895
        %904 = vst [vmem:[%s258 + $0x30] sm:$0xff] %v896
        %905 = vst [vmem:[%s258 + $0x38] sm:$0xff] %v897
        %s906 = sand.u32 %s142, 1
        %s907 = scalar_lea.sflag [#allocation5], %s906
        %s908 = sand.u32 %s142, 1
        %s909 = smul.addr %s908, 64
        %s910 = scalar_lea.vmem [#allocation8], %s909
        // Predicated region
        $region49: #{tpu_custom_call.1} parent=39 // pred_check
          %p911 = pneg %p152
        $region50: #{tpu_custom_call.1} parent=39 // pred_check_branch
          %913 = sbr.rel (%p911) target = $region52
        $region51: #{tpu_custom_call.1} parent=39 // pred_region
          %s915 = ssub.s32 1024, 1024
          %916 = vsyncadd %s907, %s915
          %s917 = smul.addr %s24, 8
          %s918 = smul.addr %s917, 128
          %s919 = scalar_lea.hbm %s5, %s918
          %s920 = sshll.u32 %s910, 4
          %s921 = int_to_ptr.vmem [resolvable:$true] %s920
          %926 = dma.vmem_to_hbm [thread:$0]  %s921, 1024, %s919, %s907, 256, 256, 16
        $region52: #{tpu_custom_call.1} parent=39 // pred_fallthru
          _
      $region40: #{tpu_custom_call.1} parent=5 // pred_fallthru
        _
      %p927 = scmp.le.s32.totalorder 2, %s19
      // Predicated region
      $region53: #{tpu_custom_call.1} parent=5 // pred_check
        %p928 = pneg %p927
      $region54: #{tpu_custom_call.1} parent=5 // pred_check_branch
        %930 = sbr.rel (%p928) target = $region56
      $region55: #{tpu_custom_call.1} parent=5 // pred_region
        %s931 = ssub.s32 %s19, 2
        // Predicated region
        $region57: #{tpu_custom_call.1} parent=55 // pred_check
          %p932 = pneg %p158
        $region58: #{tpu_custom_call.1} parent=55 // pred_check_branch
          %934 = sbr.rel (%p932) target = $region60
        $region59: #{tpu_custom_call.1} parent=55 // pred_region
          %s935 = sand.u32 %s143, 1
          %s936 = scalar_lea.sflag [#allocation5], %s935
          %s937 = sand.u32 %s143, 1
          %s938 = smul.addr %s937, 64
          %s939 = scalar_lea.vmem [#allocation8], %s938
          %940 = dma.done %s936, 1024
        $region60: #{tpu_custom_call.1} parent=55 // pred_fallthru
          _
      $region56: #{tpu_custom_call.1} parent=5 // pred_fallthru
        _
    $region6: #{tpu_custom_call.1} parent=1 // loop_footer
      %s23 = sadd.s32 1, %s19
    $region7: #{tpu_custom_call.1} parent=1 // loop_footer_branch
      %18 = sbr.rel target = $region3
    $region8: #{tpu_custom_call.1} parent=1 // loop_exit
      _
    %941 = vsyncpa [#allocation4], 1
    %s942 = scalar_lea.sflag [#allocation4], 1
    %943 = vsyncpa %s942, 1
    %944 = vsyncpa [#allocation7], 1
    %945 = vsyncpa [#allocation5], 1
    %s946 = scalar_lea.sflag [#allocation5], 1
    %947 = vsyncpa %s946, 1

</llo_original>
